<compile_context>
chip_gen: v5e
topology: v5e:2x2
jax: 0.10.0
libtpu: 0.0.40
codegen_flags: <defaults>
</compile_context>

<pallas_src>
import jax
import jax.numpy as jnp
from jax.experimental import pallas as pl
from jax.experimental.pallas import tpu as pltpu


def _slot_gate_kernel(slot_ref, intent_ref, w_ref, b_ref, v_ref, out_ref):
    slot = slot_ref[...]                  # (Bb, L, S) f32
    intent = intent_ref[...]              # (Bb, I)    f32

    # intent_linear: weight is pre-transposed to (I, S) -> no in-kernel .T.
    intent_gate = (
        jnp.dot(intent, w_ref[...], preferred_element_type=jnp.float32)
        + b_ref[...]                      # (1, S) bias broadcast
    )                                     # (Bb, S)

    # tanh(slot + intent_gate) broadcast over the sequence dim (tanh -> EUP).
    t = jnp.tanh(slot + intent_gate[:, None, :])          # (Bb, L, S)

    # g = sum_j v_j * tanh(...)_j  (+ 1e-10), per (batch, position).
    gate = jnp.sum(t * v_ref[...], axis=-1, keepdims=True) + 1e-10  # (Bb, L, 1)

    # Lane-dense (S-wide) store of the gated slot features.
    out_ref[...] = slot * gate


def slot_gate(slot_x, intent_x, w, b, v, *, batch_block=8):
    """slot_x: (B, L, S) f32; intent_x: (B, I) f32.
    w: (S, I) (PyTorch nn.Linear layout), b: (S,), v: (S,)."""
    B, L, S = slot_x.shape
    I = intent_x.shape[-1]
    assert B % batch_block == 0, "batch_block must divide batch"
    bb = batch_block

    # Wrapper-side layout prep (one-time XLA work, keeps the kernel clean):
    w_t = jnp.asarray(w, jnp.float32).T          # (I, S) pre-transposed
    b_row = jnp.asarray(b, jnp.float32).reshape(1, S)
    v_row = jnp.asarray(v, jnp.float32).reshape(1, S)

    grid = (B // bb,)

    return pl.pallas_call(
        _slot_gate_kernel,
        out_shape=jax.ShapeDtypeStruct((B, L, S), jnp.float32),
        grid_spec=pltpu.PrefetchScalarGridSpec(
            num_scalar_prefetch=0,
            grid=grid,
            in_specs=[
                pl.BlockSpec((bb, L, S), lambda i: (i, 0, 0)),  # slot_x block
                pl.BlockSpec((bb, I), lambda i: (i, 0)),        # intent_x block
                pl.BlockSpec((I, S), lambda i: (0, 0)),         # W^T (resident)
                pl.BlockSpec((1, S), lambda i: (0, 0)),         # bias (resident)
                pl.BlockSpec((1, S), lambda i: (0, 0)),         # v    (resident)
            ],
            out_specs=pl.BlockSpec((bb, L, S), lambda i: (i, 0, 0)),
        ),
        compiler_params=pltpu.CompilerParams(
            dimension_semantics=("parallel",),
        ),
    )(slot_x, intent_x, w_t, b_row, v_row)


def _reference(slot_x, intent_x, w, b, v):
    """Pure-JAX mirror of the PyTorch SlotGate.forward."""
    intent_gate = intent_x @ w.T + b                       # (B, S)
    g = v * jnp.tanh(slot_x + intent_gate[:, None, :])     # (B, L, S)
    gate = jnp.sum(g, axis=2, keepdims=True) + 1e-10       # (B, L, 1)
    return slot_x * gate


if __name__ == "__main__":
    # Shapes implied by the module: slot_c is [B, maxlen, 2*lstm_units].
    lstm_units = 64
    S_dim = 2 * lstm_units      # 128 -> lane-dense features / stores
    I_dim = 64                  # intent feature size
    B, L = 16, 16               # batch, maxlen (grid of 2 blocks of 8)

    key = jax.random.PRNGKey(0)
    k_slot, k_int, k_w, k_b, k_v = jax.random.split(key, 5)

    slot_x = jax.random.normal(k_slot, (B, L, S_dim), jnp.float32)
    intent_x = jax.random.normal(k_int, (B, I_dim), jnp.float32)
    w = 0.05 * jax.random.normal(k_w, (S_dim, I_dim), jnp.float32)  # (out, in)
    b = 0.05 * jax.random.normal(k_b, (S_dim,), jnp.float32)
    v = 0.10 * jax.random.normal(k_v, (S_dim,), jnp.float32)

    out = slot_gate(slot_x, intent_x, w, b, v, batch_block=8)
    jax.block_until_ready(out)

    ref = _reference(slot_x, intent_x, w, b, v)
    assert out.shape == (B, L, S_dim)
    assert jnp.allclose(out, ref, atol=1e-4, rtol=1e-4), float(
        jnp.max(jnp.abs(out - ref))
    )

    print("KERNEL_OK")
</pallas_src>

<mosaic_0001>
module attributes {stable_mosaic.version = 11 : i64} {
  func.func @_slot_gate_kernel(%arg0: i32, %arg1: memref<8x16x128xf32, #tpu.memory_space<vmem>>, %arg2: memref<8x64xf32, #tpu.memory_space<vmem>>, %arg3: memref<64x128xf32, #tpu.memory_space<vmem>>, %arg4: memref<1x128xf32, #tpu.memory_space<vmem>>, %arg5: memref<1x128xf32, #tpu.memory_space<vmem>>, %arg6: memref<8x16x128xf32, #tpu.memory_space<vmem>>) attributes {dimension_semantics = [#tpu.dimension_semantics<parallel>], iteration_bounds = array<i64: 2>, scalar_prefetch = 0 : i64, scratch_operands = 0 : i64, tpu.core_type = #tpu.core_type<tc>, window_params = [{transform_indices = @transform_0, window_bounds = array<i64: 8, 16, 128>}, {transform_indices = @transform_1, window_bounds = array<i64: 8, 64>}, {pipeline_mode = #tpu.pipeline_mode<synchronous>, transform_indices = @transform_2, window_bounds = array<i64: 64, 128>}, {pipeline_mode = #tpu.pipeline_mode<synchronous>, transform_indices = @transform_3, window_bounds = array<i64: 1, 128>}, {pipeline_mode = #tpu.pipeline_mode<synchronous>, transform_indices = @transform_4, window_bounds = array<i64: 1, 128>}, {transform_indices = @transform_5, window_bounds = array<i64: 8, 16, 128>}]} {
    %c0 = arith.constant 0 : index
    %c0_0 = arith.constant 0 : index
    %c0_1 = arith.constant 0 : index
    %0 = vector.load %arg1[%c0, %c0_0, %c0_1] : memref<8x16x128xf32, #tpu.memory_space<vmem>>, vector<8x16x128xf32>
    %c0_2 = arith.constant 0 : index
    %c0_3 = arith.constant 0 : index
    %1 = vector.load %arg2[%c0_2, %c0_3] : memref<8x64xf32, #tpu.memory_space<vmem>>, vector<8x64xf32>
    %c0_4 = arith.constant 0 : index
    %c0_5 = arith.constant 0 : index
    %2 = vector.load %arg3[%c0_4, %c0_5] : memref<64x128xf32, #tpu.memory_space<vmem>>, vector<64x128xf32>
    %cst = arith.constant dense<0.000000e+00> : vector<8x128xf32>
    %3 = tpu.matmul %1, %2, %cst {dimension_numbers = #tpu.dot_dimension_numbers<[1], [0], [0], [1], [0, 0, 1, 1], [], []>} : vector<8x64xf32>, vector<64x128xf32>, vector<8x128xf32> -> vector<8x128xf32>
    %c0_6 = arith.constant 0 : index
    %c0_7 = arith.constant 0 : index
    %4 = vector.load %arg4[%c0_6, %c0_7] : memref<1x128xf32, #tpu.memory_space<vmem>>, vector<1x128xf32>
    %5 = vector.broadcast %4 : vector<1x128xf32> to vector<8x128xf32>
    %6 = arith.addf %3, %5 : vector<8x128xf32>
    %7 = vector.shape_cast %6 : vector<8x128xf32> to vector<8x1x128xf32>
    %8 = vector.broadcast %7 : vector<8x1x128xf32> to vector<8x16x128xf32>
    %9 = arith.addf %0, %8 : vector<8x16x128xf32>
    %10 = math.tanh %9 : vector<8x16x128xf32>
    %c0_8 = arith.constant 0 : index
    %c0_9 = arith.constant 0 : index
    %11 = vector.load %arg5[%c0_8, %c0_9] : memref<1x128xf32, #tpu.memory_space<vmem>>, vector<1x128xf32>
    %12 = vector.shape_cast %11 : vector<1x128xf32> to vector<1x1x128xf32>
    %13 = vector.broadcast %12 : vector<1x1x128xf32> to vector<8x16x128xf32>
    %14 = arith.mulf %10, %13 : vector<8x16x128xf32>
    %cst_10 = arith.constant dense<0.000000e+00> : vector<8x16xf32>
    %15 = vector.multi_reduction <add>, %14, %cst_10 [2] : vector<8x16x128xf32> to vector<8x16xf32>
    %16 = vector.shape_cast %15 : vector<8x16xf32> to vector<8x16x1xf32>
    %cst_11 = arith.constant 1.000000e-10 : f32
    %17 = vector.broadcast %cst_11 : f32 to vector<8x16x1xf32>
    %18 = arith.addf %16, %17 : vector<8x16x1xf32>
    %19 = vector.broadcast %18 : vector<8x16x1xf32> to vector<8x16x128xf32>
    %20 = arith.mulf %0, %19 : vector<8x16x128xf32>
    %c0_12 = arith.constant 0 : index
    %c0_13 = arith.constant 0 : index
    %c0_14 = arith.constant 0 : index
    %21 = vector.load %arg6[%c0_12, %c0_13, %c0_14] : memref<8x16x128xf32, #tpu.memory_space<vmem>>, vector<8x16x128xf32>
    tpu.vector_store %arg6[%c0_12, %c0_13, %c0_14], %20 {strides = array<i32>} : memref<8x16x128xf32, #tpu.memory_space<vmem>>, vector<8x16x128xf32>,
    return
  }
  func.func @transform_0(%arg0: i32) -> (i32, i32, i32) {
    %c0_i32 = arith.constant 0 : i32
    %c0_i32_0 = arith.constant 0 : i32
    %c0_i32_1 = arith.constant 0 : i32
    return %arg0, %c0_i32, %c0_i32_0 : i32, i32, i32
  }
  func.func @transform_1(%arg0: i32) -> (i32, i32) {
    %c0_i32 = arith.constant 0 : i32
    %c0_i32_0 = arith.constant 0 : i32
    return %arg0, %c0_i32 : i32, i32
  }
  func.func @transform_2(%arg0: i32) -> (i32, i32) {
    %c0_i32 = arith.constant 0 : i32
    %c0_i32_0 = arith.constant 0 : i32
    %c0_i32_1 = arith.constant 0 : i32
    return %c0_i32, %c0_i32_0 : i32, i32
  }
  func.func @transform_3(%arg0: i32) -> (i32, i32) {
    %c0_i32 = arith.constant 0 : i32
    %c0_i32_0 = arith.constant 0 : i32
    %c0_i32_1 = arith.constant 0 : i32
    return %c0_i32, %c0_i32_0 : i32, i32
  }
  func.func @transform_4(%arg0: i32) -> (i32, i32) {
    %c0_i32 = arith.constant 0 : i32
    %c0_i32_0 = arith.constant 0 : i32
    %c0_i32_1 = arith.constant 0 : i32
    return %c0_i32, %c0_i32_0 : i32, i32
  }
  func.func @transform_5(%arg0: i32) -> (i32, i32, i32) {
    %c0_i32 = arith.constant 0 : i32
    %c0_i32_0 = arith.constant 0 : i32
    %c0_i32_1 = arith.constant 0 : i32
    return %arg0, %c0_i32, %c0_i32_0 : i32, i32, i32
  }
}

</mosaic_0001>

<llo_original>
// kernel: tpu_custom_call.1
$region0: #{tpu_custom_call.1}
  #allocation0 [shape = 'u32[]', space=smem, size = 0x4, offset = 0x4, fixed_abs, tag = 'smem constant byte address 0x4 - core index']
  #allocation1 [shape = 'u32[72,128]{1,0:T(1,128)}', space=vmem, size = 0x9000, scoped, tag = 'internal scratch']
  %s0 = inlined_call_operand.hbm [shape: f32[16,16,128], index: 0, kind: input, shape index: {}]
  %s1 = inlined_call_operand.hbm [shape: f32[16,64], index: 1, kind: input, shape index: {}]
  %s2 = inlined_call_operand.hbm [shape: f32[64,128], index: 2, kind: input, shape index: {}]
  %s3 = inlined_call_operand.vmem [shape: f32[1,128], index: 3, kind: input, shape index: {}]
  %s4 = inlined_call_operand.vmem [shape: f32[1,128], index: 4, kind: input, shape index: {}]
  %s5 = inlined_call_operand.hbm [shape: f32[16,16,128], index: 5, kind: output, shape index: {}]
  %s6 = sld [smem:[#allocation0]]
  $region65: #{tpu_custom_call.1} parent=0
    _
  %s8 = ssub.s32 1, %s6
  %s9 = scalar_select 0, %s8, %s6
  $region1: #{tpu_custom_call.1} parent=0
    #allocation2 [shape = 'u8[131072]{0}', space=vmem, size = 0x20000, scoped, tag = 'input window, operand 0']
    #allocation3 [shape = 's32[2]{0}', space=sflag, size = 0x8, scoped, tag = 'scoped memory for tpu_custom_call.1']
    #allocation4 [shape = 's32[2]{0}', space=sflag, size = 0x8, scoped, tag = 'scoped memory for tpu_custom_call.1']
    #allocation5 [shape = 'u8[8192]{0}', space=vmem, size = 0x2000, scoped, tag = 'input window, operand 1']
    #allocation6 [shape = 's32[2]{0}', space=sflag, size = 0x8, scoped, tag = 'scoped memory for tpu_custom_call.1']
    #allocation7 [shape = 'u8[32768]{0}', space=vmem, size = 0x8000, scoped, tag = 'input window, operand 2, single buffered']
    #allocation8 [shape = 'u8[131072]{0}', space=vmem, size = 0x20000, scoped, tag = 'output window, operand 0']
    %10 = vsyncpa [#allocation3], 0
    %s11 = scalar_lea.sflag [#allocation3], 1
    %12 = vsyncpa %s11, 0
    %13 = vsyncpa [#allocation6], 0
    %s14 = scalar_lea.sflag [#allocation6], 1
    %15 = vsyncpa %s14, 0
    %16 = vsyncpa [#allocation4], 0
    %s17 = scalar_lea.sflag [#allocation4], 1
    %18 = vsyncpa %s17, 0
    loop: start=0, step=1, limit=4
    $region2: #{tpu_custom_call.1} parent=1 // loop_pre_header
      _
    $region3: #{tpu_custom_call.1} parent=1 // loop_header
      %s20 = sphi 0, %s24
      %p21 = scmp.ge.s32.totalorder %s20, 4
      %s30 = sphi 0, %s32
      %s33 = sphi 0, %s30
      %s34 = sphi 0, %s33
      %s50 = sphi 0, %s34
      %s56 = sphi 0, %s58
      %s59 = sphi 0, %s56
      %s60 = sphi 0, %s59
      %s76 = sphi 0, %s60
      %s80 = sphi 0, %s80
      %s82 = sphi 0, %s80
      %s83 = sphi 0, %s82
      %s97 = sphi 0, %s83
      %s101 = sphi 0, %s101
      %s103 = sphi 0, %s101
      %s104 = sphi 0, %s103
      %s118 = sphi 0, %s104
      %s122 = sphi 0, %s122
      %s124 = sphi 0, %s122
      %s125 = sphi 0, %s124
      %s139 = sphi 0, %s125
      %s145 = sphi 0, %s147
      %s148 = sphi 0, %s145
      %s149 = sphi 0, %s148
      %s165 = sphi 0, %s149
    $region4: #{tpu_custom_call.1} parent=1 // loop_header_branch
      %23 = sbr.rel (%p21) target = $region8
    $region5: #{tpu_custom_call.1} parent=1 // loop_body
      %s25 = ssub.s32 %s20, 1
      %s26 = ssub.s32 %s20, 2
      %s27 = sadd.s32 %s20, 1
      %s28 = ssub.s32 %s20, %s27
      %p29 = scmp.eq.s32.totalorder %s28, 0
      %s31 = sadd.s32 %s30, 1
      %s32 = scalar_select %p29, %s30, %s31
      %p35 = pneg %p29
      %p36 = scmp.eq.s32.totalorder %s20, 1
      %p37 = por %p35, %p36
      %p38 = scmp.ne.s32.totalorder %s30, %s33
      %p39 = scmp.eq.s32.totalorder %s20, 0
      %p40 = por %p38, %p39
      %p41 = scmp.ne.s32.totalorder %s30, %s33
      %p42 = scmp.eq.s32.totalorder %s25, 1
      %p43 = por %p41, %p42
      %p44 = scmp.ne.s32.totalorder %s33, %s34
      %p45 = scmp.eq.s32.totalorder %s25, 0
      %p46 = por %p44, %p45
      %p47 = scmp.ne.s32.totalorder %s33, %s34
      %p48 = scmp.eq.s32.totalorder %s26, 1
      %p49 = por %p47, %p48
      %p51 = scmp.ne.s32.totalorder %s34, %s50
      %p52 = scmp.eq.s32.totalorder %s26, 0
      %p53 = por %p51, %p52
      %s54 = ssub.s32 %s20, %s27
      %p55 = scmp.eq.s32.totalorder %s54, 0
      %s57 = sadd.s32 %s56, 1
      %s58 = scalar_select %p55, %s56, %s57
      %p61 = pneg %p55
      %p62 = scmp.eq.s32.totalorder %s20, 1
      %p63 = por %p61, %p62
      %p64 = scmp.ne.s32.totalorder %s56, %s59
      %p65 = scmp.eq.s32.totalorder %s20, 0
      %p66 = por %p64, %p65
      %p67 = scmp.ne.s32.totalorder %s56, %s59
      %p68 = scmp.eq.s32.totalorder %s25, 1
      %p69 = por %p67, %p68
      %p70 = scmp.ne.s32.totalorder %s59, %s60
      %p71 = scmp.eq.s32.totalorder %s25, 0
      %p72 = por %p70, %p71
      %p73 = scmp.ne.s32.totalorder %s59, %s60
      %p74 = scmp.eq.s32.totalorder %s26, 1
      %p75 = por %p73, %p74
      %p77 = scmp.ne.s32.totalorder %s60, %s76
      %p78 = scmp.eq.s32.totalorder %s26, 0
      %p79 = por %p77, %p78
      %s81 = sadd.s32 %s80, 1
      %p84 = scmp.eq.s32.totalorder %s20, 1
      %p85 = scmp.ne.s32.totalorder %s80, %s82
      %p86 = scmp.eq.s32.totalorder %s20, 0
      %p87 = por %p85, %p86
      %p88 = scmp.ne.s32.totalorder %s80, %s82
      %p89 = scmp.eq.s32.totalorder %s25, 1
      %p90 = por %p88, %p89
      %p91 = scmp.ne.s32.totalorder %s82, %s83
      %p92 = scmp.eq.s32.totalorder %s25, 0
      %p93 = por %p91, %p92
      %p94 = scmp.ne.s32.totalorder %s82, %s83
      %p95 = scmp.eq.s32.totalorder %s26, 1
      %p96 = por %p94, %p95
      %p98 = scmp.ne.s32.totalorder %s83, %s97
      %p99 = scmp.eq.s32.totalorder %s26, 0
      %p100 = por %p98, %p99
      %s102 = sadd.s32 %s101, 1
      %p105 = scmp.eq.s32.totalorder %s20, 1
      %p106 = scmp.ne.s32.totalorder %s101, %s103
      %p107 = scmp.eq.s32.totalorder %s20, 0
      %p108 = por %p106, %p107
      %p109 = scmp.ne.s32.totalorder %s101, %s103
      %p110 = scmp.eq.s32.totalorder %s25, 1
      %p111 = por %p109, %p110
      %p112 = scmp.ne.s32.totalorder %s103, %s104
      %p113 = scmp.eq.s32.totalorder %s25, 0
      %p114 = por %p112, %p113
      %p115 = scmp.ne.s32.totalorder %s103, %s104
      %p116 = scmp.eq.s32.totalorder %s26, 1
      %p117 = por %p115, %p116
      %p119 = scmp.ne.s32.totalorder %s104, %s118
      %p120 = scmp.eq.s32.totalorder %s26, 0
      %p121 = por %p119, %p120
      %s123 = sadd.s32 %s122, 1
      %p126 = scmp.eq.s32.totalorder %s20, 1
      %p127 = scmp.ne.s32.totalorder %s122, %s124
      %p128 = scmp.eq.s32.totalorder %s20, 0
      %p129 = por %p127, %p128
      %p130 = scmp.ne.s32.totalorder %s122, %s124
      %p131 = scmp.eq.s32.totalorder %s25, 1
      %p132 = por %p130, %p131
      %p133 = scmp.ne.s32.totalorder %s124, %s125
      %p134 = scmp.eq.s32.totalorder %s25, 0
      %p135 = por %p133, %p134
      %p136 = scmp.ne.s32.totalorder %s124, %s125
      %p137 = scmp.eq.s32.totalorder %s26, 1
      %p138 = por %p136, %p137
      %p140 = scmp.ne.s32.totalorder %s125, %s139
      %p141 = scmp.eq.s32.totalorder %s26, 0
      %p142 = por %p140, %p141
      %s143 = ssub.s32 %s20, %s27
      %p144 = scmp.eq.s32.totalorder %s143, 0
      %s146 = sadd.s32 %s145, 1
      %s147 = scalar_select %p144, %s145, %s146
      %p150 = pneg %p144
      %p151 = scmp.eq.s32.totalorder %s20, 1
      %p152 = por %p150, %p151
      %p153 = scmp.ne.s32.totalorder %s145, %s148
      %p154 = scmp.eq.s32.totalorder %s20, 0
      %p155 = por %p153, %p154
      %p156 = scmp.ne.s32.totalorder %s145, %s148
      %p157 = scmp.eq.s32.totalorder %s25, 1
      %p158 = por %p156, %p157
      %p159 = scmp.ne.s32.totalorder %s148, %s149
      %p160 = scmp.eq.s32.totalorder %s25, 0
      %p161 = por %p159, %p160
      %p162 = scmp.ne.s32.totalorder %s148, %s149
      %p163 = scmp.eq.s32.totalorder %s26, 1
      %p164 = por %p162, %p163
      %p166 = scmp.ne.s32.totalorder %s149, %s165
      %p167 = scmp.eq.s32.totalorder %s26, 0
      %p168 = por %p166, %p167
      %p169 = scmp.le.s32.totalorder 1, %s20
      %p170 = scmp.lt.s32.totalorder %s20, 3
      %p171 = pnand %p169, %p170
      %p172 = pneg %p171
      // Predicated region
      $region9: #{tpu_custom_call.1} parent=5 // pred_check
        _
      $region10: #{tpu_custom_call.1} parent=5 // pred_check_branch
        %174 = sbr.rel (%p171) target = $region12
      $region11: #{tpu_custom_call.1} parent=5 // pred_region
        %s175 = ssub.s32 %s20, 1
        // Predicated region
        $region13: #{tpu_custom_call.1} parent=11 // pred_check
          %p176 = pneg %p93
        $region14: #{tpu_custom_call.1} parent=11 // pred_check_branch
          %178 = sbr.rel (%p176) target = $region16
        $region15: #{tpu_custom_call.1} parent=11 // pred_region
          %180 = vsyncadd [#allocation6], 0
          %s181 = sshll.u32 %s2, 4
          %s182 = int_to_ptr.hbm [resolvable:$true] %s181
          %s183 = sshll.u32 [#allocation7], 4
          %s184 = int_to_ptr.vmem [resolvable:$true] %s183
          %189 = dma.hbm_to_vmem [thread:$0]  %s182, 1024, %s184, [#allocation6], 128, 128, 8
        $region16: #{tpu_custom_call.1} parent=11 // pred_fallthru
          _
        // Predicated region
        $region17: #{tpu_custom_call.1} parent=11 // pred_check
          %p190 = pneg %p114
        $region18: #{tpu_custom_call.1} parent=11 // pred_check_branch
          %192 = sbr.rel (%p190) target = $region20
        $region19: #{tpu_custom_call.1} parent=11 // pred_region
          _
        $region20: #{tpu_custom_call.1} parent=11 // pred_fallthru
          _
        // Predicated region
        $region21: #{tpu_custom_call.1} parent=11 // pred_check
          %p193 = pneg %p135
        $region22: #{tpu_custom_call.1} parent=11 // pred_check_branch
          %195 = sbr.rel (%p193) target = $region24
        $region23: #{tpu_custom_call.1} parent=11 // pred_region
          _
        $region24: #{tpu_custom_call.1} parent=11 // pred_fallthru
          _
      $region12: #{tpu_custom_call.1} parent=5 // pred_fallthru
        _
      %p196 = scmp.lt.s32.totalorder %s20, 2
      // Predicated region
      $region25: #{tpu_custom_call.1} parent=5 // pred_check
        %p197 = pneg %p196
      $region26: #{tpu_custom_call.1} parent=5 // pred_check_branch
        %199 = sbr.rel (%p197) target = $region28
      $region27: #{tpu_custom_call.1} parent=5 // pred_region
        // Predicated region
        $region29: #{tpu_custom_call.1} parent=27 // pred_check
          %p200 = pneg %p40
        $region30: #{tpu_custom_call.1} parent=27 // pred_check_branch
          %202 = sbr.rel (%p200) target = $region32
        $region31: #{tpu_custom_call.1} parent=27 // pred_region
          %s203 = sand.u32 %s30, 1
          %s204 = scalar_lea.sflag [#allocation3], %s203
          %s205 = sand.u32 %s30, 1
          %s206 = smul.addr %s205, 128
          %s207 = scalar_lea.vmem [#allocation2], %s206
          %s208 = smul.u32 8, %s20
          %210 = vsyncadd %s204, 0
          %s211 = smul.addr %s208, 2
          %s212 = smul.addr %s211, 8
          %s213 = scalar_lea.hbm %s0, %s212
          %s214 = sshll.u32 %s213, 4
          %s215 = int_to_ptr.hbm [resolvable:$true] %s214
          %s216 = sshll.u32 %s207, 4
          %s217 = int_to_ptr.vmem [resolvable:$true] %s216
          %222 = dma.hbm_to_vmem [thread:$0]  %s215, 2048, %s217, %s204, 128, 128, 8
        $region32: #{tpu_custom_call.1} parent=27 // pred_fallthru
          _
        // Predicated region
        $region33: #{tpu_custom_call.1} parent=27 // pred_check
          %p223 = pneg %p66
        $region34: #{tpu_custom_call.1} parent=27 // pred_check_branch
          %225 = sbr.rel (%p223) target = $region36
        $region35: #{tpu_custom_call.1} parent=27 // pred_region
          %s226 = sand.u32 %s20, 1
          %s227 = scalar_lea.sflag [#allocation6], %s226
          %s228 = sand.u32 %s56, 1
          %s229 = smul.addr %s228, 8
          %s230 = scalar_lea.vmem [#allocation5], %s229
          %232 = vsyncadd %s227, 0
          %s233 = smul.addr %s20, 8
          %s234 = scalar_lea.hbm %s1, %s233
          %s236 = sshll.u32 %s234, 4
          %s237 = int_to_ptr.hbm [resolvable:$true] %s236
          %s238 = sshll.u32 %s230, 4
          %s239 = int_to_ptr.vmem [resolvable:$true] %s238
          %241 = dma.hbm_to_vmem [thread:$0]  %s237, 128, %s239, %s227
        $region36: #{tpu_custom_call.1} parent=27 // pred_fallthru
          _
      $region28: #{tpu_custom_call.1} parent=5 // pred_fallthru
        _
      %p242 = scmp.le.s32.totalorder 1, %s20
      %p243 = scmp.lt.s32.totalorder %s20, 3
      %p244 = pnand %p242, %p243
      %p245 = pneg %p244
      // Predicated region
      $region37: #{tpu_custom_call.1} parent=5 // pred_check
        _
      $region38: #{tpu_custom_call.1} parent=5 // pred_check_branch
        %247 = sbr.rel (%p244) target = $region40
      $region39: #{tpu_custom_call.1} parent=5 // pred_region
        %s248 = ssub.s32 %s20, 1
        %s249 = sand.u32 %s33, 1
        %s250 = scalar_lea.sflag [#allocation3], %s249
        %s251 = sand.u32 %s33, 1
        %s252 = smul.addr %s251, 128
        %s253 = scalar_lea.vmem [#allocation2], %s252
        // Predicated region
        $region41: #{tpu_custom_call.1} parent=39 // pred_check
          %p254 = pneg %p46
        $region42: #{tpu_custom_call.1} parent=39 // pred_check_branch
          %256 = sbr.rel (%p254) target = $region44
        $region43: #{tpu_custom_call.1} parent=39 // pred_region
          %258 = dma.done %s250, 2048
        $region44: #{tpu_custom_call.1} parent=39 // pred_fallthru
          _
        %s259 = sand.u32 %s25, 1
        %s260 = scalar_lea.sflag [#allocation6], %s259
        %s261 = sand.u32 %s59, 1
        %s262 = smul.addr %s261, 8
        %s263 = scalar_lea.vmem [#allocation5], %s262
        // Predicated region
        $region45: #{tpu_custom_call.1} parent=39 // pred_check
          %p264 = pneg %p72
        $region46: #{tpu_custom_call.1} parent=39 // pred_check_branch
          %266 = sbr.rel (%p264) target = $region48
        $region47: #{tpu_custom_call.1} parent=39 // pred_region
          %268 = dma.done %s260, 128
        $region48: #{tpu_custom_call.1} parent=39 // pred_fallthru
          _
        // Predicated region
        $region49: #{tpu_custom_call.1} parent=39 // pred_check
          %p269 = pneg %p93
        $region50: #{tpu_custom_call.1} parent=39 // pred_check_branch
          %271 = sbr.rel (%p269) target = $region52
        $region51: #{tpu_custom_call.1} parent=39 // pred_region
          %273 = dma.done [#allocation6], 1024
        $region52: #{tpu_custom_call.1} parent=39 // pred_fallthru
          _
        %s274 = sand.u32 %s33, 1
        %s275 = scalar_lea.sflag [#allocation3], %s274
        %s276 = sand.u32 %s33, 1
        %s277 = smul.addr %s276, 128
        %s278 = scalar_lea.vmem [#allocation2], %s277
        %p279 = pneg %p46
        %p280 = pneg %p43
        %s281 = sand.u32 %s25, 1
        %s282 = scalar_lea.sflag [#allocation6], %s281
        %s283 = sand.u32 %s59, 1
        %s284 = smul.addr %s283, 8
        %s285 = scalar_lea.vmem [#allocation5], %s284
        %p286 = pneg %p72
        %p287 = pneg %p69
        %p288 = pneg %p93
        %p289 = pneg %p90
        %p290 = pneg %p114
        %p291 = pneg %p111
        %p292 = pneg %p135
        %p293 = pneg %p132
        %p294 = pneg %p161
        %p295 = pneg %p158
        %s296 = sand.u32 %s148, 1
        %s297 = scalar_lea.sflag [#allocation4], %s296
        %s298 = sand.u32 %s148, 1
        %s299 = smul.addr %s298, 128
        %s300 = scalar_lea.vmem [#allocation8], %s299
        %s301 = smul.u32 8, %s25
        %s302 = smul.u32 8, %s25
        %v303 = vld [vmem:[%s253] sm:$0xff]
        %v304 = vld [vmem:[%s253 + $0x8] sm:$0xff]
        %v305 = vld [vmem:[%s253 + $0x10] sm:$0xff]
        %v306 = vld [vmem:[%s253 + $0x18] sm:$0xff]
        %v307 = vld [vmem:[%s253 + $0x20] sm:$0xff]
        %v308 = vld [vmem:[%s253 + $0x28] sm:$0xff]
        %v309 = vld [vmem:[%s253 + $0x30] sm:$0xff]
        %v310 = vld [vmem:[%s253 + $0x38] sm:$0xff]
        %v311 = vld [vmem:[%s253 + $0x40] sm:$0xff]
        %v312 = vld [vmem:[%s253 + $0x48] sm:$0xff]
        %v313 = vld [vmem:[%s253 + $0x50] sm:$0xff]
        %v314 = vld [vmem:[%s253 + $0x58] sm:$0xff]
        %v315 = vld [vmem:[%s253 + $0x60] sm:$0xff]
        %v316 = vld [vmem:[%s253 + $0x68] sm:$0xff]
        %v317 = vld [vmem:[%s253 + $0x70] sm:$0xff]
        %v318 = vld [vmem:[%s253 + $0x78] sm:$0xff]
        %v319 = vld [vmem:[%s263] sm:$0xff]
        %v320 = vld [vmem:[#allocation7] sm:$0xff]
        %v321 = vld [vmem:[#allocation7 + $0x8] sm:$0xff]
        %v322 = vld [vmem:[#allocation7 + $0x10] sm:$0xff]
        %v323 = vld [vmem:[#allocation7 + $0x18] sm:$0xff]
        %v324 = vld [vmem:[#allocation7 + $0x20] sm:$0xff]
        %v325 = vld [vmem:[#allocation7 + $0x28] sm:$0xff]
        %v326 = vld [vmem:[#allocation7 + $0x30] sm:$0xff]
        %v327 = vld [vmem:[#allocation7 + $0x38] sm:$0xff]
        %v328 = vld [vmem:[%s3] sm:$0x1]
        %v330 = vperm.slane %v328, 0
        %vm332 = vcmask 523264
        %v334 = vsel %vm332, %v319, 0
        %336 = vmatpush.msra.mxu0 0.0
        %337 = vmatpush.msra.mxu0 0.0
        %338 = vmatpush.msra.mxu0 0.0
        %339 = vmatpush.msra.mxu0 0.0
        %340 = vmatpush.msra.mxu0 0.0
        %341 = vmatpush.msra.mxu0 0.0
        %342 = vmatpush.msra.mxu0 0.0
        %343 = vmatpush.msra.mxu0 0.0
        %344 = vmatpush.msra.mxu0 %v327
        %345 = vmatpush.msra.mxu0 %v326
        %346 = vmatpush.msra.mxu0 %v325
        %347 = vmatpush.msra.mxu0 %v324
        %348 = vmatpush.msra.mxu0 %v323
        %349 = vmatpush.msra.mxu0 %v322
        %350 = vmatpush.msra.mxu0 %v321
        %351 = vmatpush.msra.mxu0 %v320
        %352 = vmatmul.f32.gmra.mxu0 %v334
        %v353 = vpop.f32.mrf.mxu0
        %v354 = vadd.f32 %v330, %v353
        %355 = vdwg.mxu0
        %v357 = vrot.slane %v354, 1
        %v358 = vrot.slane %v354, 2
        %v359 = vrot.slane %v354, 3
        %v360 = vrot.slane %v354, 4
        %v361 = vrot.slane %v354, 5
        %v362 = vrot.slane %v354, 6
        %v363 = vrot.slane %v354, 7
        %v364 = vperm.slane %v354, 0
        %v365 = vperm.slane %v357, 0
        %v366 = vperm.slane %v358, 0
        %v367 = vperm.slane %v359, 0
        %v368 = vperm.slane %v360, 0
        %v369 = vperm.slane %v361, 0
        %v370 = vperm.slane %v362, 0
        %v371 = vperm.slane %v363, 0
        %v380 = vadd.f32 %v303, %v364
        %v381 = vadd.f32 %v304, %v364
        %v382 = vadd.f32 %v305, %v365
        %v383 = vadd.f32 %v306, %v365
        %v384 = vadd.f32 %v307, %v366
        %v385 = vadd.f32 %v308, %v366
        %v386 = vadd.f32 %v309, %v367
        %v387 = vadd.f32 %v310, %v367
        %v388 = vadd.f32 %v311, %v368
        %v389 = vadd.f32 %v312, %v368
        %v390 = vadd.f32 %v313, %v369
        %v391 = vadd.f32 %v314, %v369
        %v392 = vadd.f32 %v315, %v370
        %v393 = vadd.f32 %v316, %v370
        %v394 = vadd.f32 %v317, %v371
        %v395 = vadd.f32 %v318, %v371
        %v396 = vtanh.pop %v380
        %v397 = vtanh.pop %v381
        %v398 = vtanh.pop %v382
        %v399 = vtanh.pop %v383
        %v400 = vtanh.pop %v384
        %v401 = vtanh.pop %v385
        %v402 = vtanh.pop %v386
        %v403 = vtanh.pop %v387
        %v404 = vtanh.pop %v388
        %v405 = vtanh.pop %v389
        %v406 = vtanh.pop %v390
        %v407 = vtanh.pop %v391
        %v408 = vtanh.pop %v392
        %v409 = vtanh.pop %v393
        %v410 = vtanh.pop %v394
        %v411 = vtanh.pop %v395
        %v412 = vld [vmem:[%s4] sm:$0x1]
        %v414 = vperm.slane %v412, 0
        %v416 = vmul.f32 %v396, %v414
        %v417 = vmul.f32 %v397, %v414
        %v418 = vmul.f32 %v398, %v414
        %v419 = vmul.f32 %v399, %v414
        %v420 = vmul.f32 %v400, %v414
        %v421 = vmul.f32 %v401, %v414
        %v422 = vmul.f32 %v402, %v414
        %v423 = vmul.f32 %v403, %v414
        %v424 = vmul.f32 %v404, %v414
        %v425 = vmul.f32 %v405, %v414
        %v426 = vmul.f32 %v406, %v414
        %v427 = vmul.f32 %v407, %v414
        %v428 = vmul.f32 %v408, %v414
        %v429 = vmul.f32 %v409, %v414
        %v430 = vmul.f32 %v410, %v414
        %v431 = vmul.f32 %v411, %v414
        %432 = vadd.xlane.f32.xlu0 %v416
        %v433 = vpop.xlane.xlu0 %432
        %434 = vadd.xlane.f32.xlu0 %v417
        %v435 = vpop.xlane.xlu0 %434
        %436 = vadd.xlane.f32.xlu0 %v418
        %v437 = vpop.xlane.xlu0 %436
        %438 = vadd.xlane.f32.xlu0 %v419
        %v439 = vpop.xlane.xlu0 %438
        %440 = vadd.xlane.f32.xlu0 %v420
        %v441 = vpop.xlane.xlu0 %440
        %442 = vadd.xlane.f32.xlu0 %v421
        %v443 = vpop.xlane.xlu0 %442
        %444 = vadd.xlane.f32.xlu0 %v422
        %v445 = vpop.xlane.xlu0 %444
        %446 = vadd.xlane.f32.xlu0 %v423
        %v447 = vpop.xlane.xlu0 %446
        %448 = vadd.xlane.f32.xlu0 %v424
        %v449 = vpop.xlane.xlu0 %448
        %450 = vadd.xlane.f32.xlu0 %v425
        %v451 = vpop.xlane.xlu0 %450
        %452 = vadd.xlane.f32.xlu0 %v426
        %v453 = vpop.xlane.xlu0 %452
        %454 = vadd.xlane.f32.xlu0 %v427
        %v455 = vpop.xlane.xlu0 %454
        %456 = vadd.xlane.f32.xlu0 %v428
        %v457 = vpop.xlane.xlu0 %456
        %458 = vadd.xlane.f32.xlu0 %v429
        %v459 = vpop.xlane.xlu0 %458
        %460 = vadd.xlane.f32.xlu0 %v430
        %v461 = vpop.xlane.xlu0 %460
        %462 = vadd.xlane.f32.xlu0 %v431
        %v463 = vpop.xlane.xlu0 %462
        %v464 = vadd.f32 %v433, 1e-10
        %v465 = vadd.f32 %v435, 1e-10
        %v466 = vadd.f32 %v437, 1e-10
        %v467 = vadd.f32 %v439, 1e-10
        %v468 = vadd.f32 %v441, 1e-10
        %v469 = vadd.f32 %v443, 1e-10
        %v470 = vadd.f32 %v445, 1e-10
        %v471 = vadd.f32 %v447, 1e-10
        %v472 = vadd.f32 %v449, 1e-10
        %v473 = vadd.f32 %v451, 1e-10
        %v474 = vadd.f32 %v453, 1e-10
        %v475 = vadd.f32 %v455, 1e-10
        %v476 = vadd.f32 %v457, 1e-10
        %v477 = vadd.f32 %v459, 1e-10
        %v478 = vadd.f32 %v461, 1e-10
        %v479 = vadd.f32 %v463, 1e-10
        %v480 = vmul.f32 %v303, %v464
        %v481 = vmul.f32 %v304, %v465
        %v482 = vmul.f32 %v305, %v466
        %v483 = vmul.f32 %v306, %v467
        %v484 = vmul.f32 %v307, %v468
        %v485 = vmul.f32 %v308, %v469
        %v486 = vmul.f32 %v309, %v470
        %v487 = vmul.f32 %v310, %v471
        %v488 = vmul.f32 %v311, %v472
        %v489 = vmul.f32 %v312, %v473
        %v490 = vmul.f32 %v313, %v474
        %v491 = vmul.f32 %v314, %v475
        %v492 = vmul.f32 %v315, %v476
        %v493 = vmul.f32 %v316, %v477
        %v494 = vmul.f32 %v317, %v478
        %v495 = vmul.f32 %v318, %v479
        %496 = vst [vmem:[%s300] sm:$0xff] %v480
        %497 = vst [vmem:[%s300 + $0x8] sm:$0xff] %v481
        %498 = vst [vmem:[%s300 + $0x10] sm:$0xff] %v482
        %499 = vst [vmem:[%s300 + $0x18] sm:$0xff] %v483
        %500 = vst [vmem:[%s300 + $0x20] sm:$0xff] %v484
        %501 = vst [vmem:[%s300 + $0x28] sm:$0xff] %v485
        %502 = vst [vmem:[%s300 + $0x30] sm:$0xff] %v486
        %503 = vst [vmem:[%s300 + $0x38] sm:$0xff] %v487
        %504 = vst [vmem:[%s300 + $0x40] sm:$0xff] %v488
        %505 = vst [vmem:[%s300 + $0x48] sm:$0xff] %v489
        %506 = vst [vmem:[%s300 + $0x50] sm:$0xff] %v490
        %507 = vst [vmem:[%s300 + $0x58] sm:$0xff] %v491
        %508 = vst [vmem:[%s300 + $0x60] sm:$0xff] %v492
        %509 = vst [vmem:[%s300 + $0x68] sm:$0xff] %v493
        %510 = vst [vmem:[%s300 + $0x70] sm:$0xff] %v494
        %511 = vst [vmem:[%s300 + $0x78] sm:$0xff] %v495
        %s512 = sand.u32 %s148, 1
        %s513 = scalar_lea.sflag [#allocation4], %s512
        %s514 = sand.u32 %s148, 1
        %s515 = smul.addr %s514, 128
        %s516 = scalar_lea.vmem [#allocation8], %s515
        // Predicated region
        $region53: #{tpu_custom_call.1} parent=39 // pred_check
          %p517 = pneg %p158
        $region54: #{tpu_custom_call.1} parent=39 // pred_check_branch
          %519 = sbr.rel (%p517) target = $region56
        $region55: #{tpu_custom_call.1} parent=39 // pred_region
          %s520 = smul.u32 8, %s25
          %522 = vsyncadd %s513, 0
          %s523 = smul.addr %s520, 2
          %s524 = smul.addr %s523, 8
          %s525 = scalar_lea.hbm %s5, %s524
          %s526 = sshll.u32 %s516, 4
          %s527 = int_to_ptr.vmem [resolvable:$true] %s526
          %s528 = sshll.u32 %s525, 4
          %s529 = int_to_ptr.hbm [resolvable:$true] %s528
          %534 = dma.vmem_to_hbm [thread:$0]  %s527, 2048, %s529, %s513, 128, 128, 8
        $region56: #{tpu_custom_call.1} parent=39 // pred_fallthru
          _
      $region40: #{tpu_custom_call.1} parent=5 // pred_fallthru
        _
      %p535 = scmp.le.s32.totalorder 2, %s20
      // Predicated region
      $region57: #{tpu_custom_call.1} parent=5 // pred_check
        %p536 = pneg %p535
      $region58: #{tpu_custom_call.1} parent=5 // pred_check_branch
        %538 = sbr.rel (%p536) target = $region60
      $region59: #{tpu_custom_call.1} parent=5 // pred_region
        %s539 = ssub.s32 %s20, 2
        // Predicated region
        $region61: #{tpu_custom_call.1} parent=59 // pred_check
          %p540 = pneg %p164
        $region62: #{tpu_custom_call.1} parent=59 // pred_check_branch
          %542 = sbr.rel (%p540) target = $region64
        $region63: #{tpu_custom_call.1} parent=59 // pred_region
          %s543 = sand.u32 %s149, 1
          %s544 = scalar_lea.sflag [#allocation4], %s543
          %s545 = sand.u32 %s149, 1
          %s546 = smul.addr %s545, 128
          %s547 = scalar_lea.vmem [#allocation8], %s546
          %549 = dma.done %s544, 2048
        $region64: #{tpu_custom_call.1} parent=59 // pred_fallthru
          _
      $region60: #{tpu_custom_call.1} parent=5 // pred_fallthru
        _
    $region6: #{tpu_custom_call.1} parent=1 // loop_footer
      %s24 = sadd.s32 1, %s20
    $region7: #{tpu_custom_call.1} parent=1 // loop_footer_branch
      %19 = sbr.rel target = $region3
    $region8: #{tpu_custom_call.1} parent=1 // loop_exit
      _
    %550 = vsyncpa [#allocation3], 1
    %s551 = scalar_lea.sflag [#allocation3], 1
    %552 = vsyncpa %s551, 1
    %553 = vsyncpa [#allocation6], 1
    %s554 = scalar_lea.sflag [#allocation6], 1
    %555 = vsyncpa %s554, 1
    %556 = vsyncpa [#allocation4], 1
    %s557 = scalar_lea.sflag [#allocation4], 1
    %558 = vsyncpa %s557, 1

</llo_original>
